<compile_context>
chip_gen: v6e
topology: v6e:2x2x1
jax: 0.10.0
libtpu: 0.0.40
codegen_flags: <defaults>
</compile_context>

<pallas_src>
import functools

import jax
import jax.numpy as jnp
from jax.experimental import pallas as pl
from jax.experimental.pallas import tpu as pltpu

DIMS = 32              # `dims` constructor arg
NUM_BNKS = 3           # fixed in the module
NUM_LAYERS = 4         # fixed in the module
HID = DIMS + NUM_BNKS  # 35  (per-branch hidden width)
PACKED = 2 * HID       # 70  (both branches side by side)
HID_W = 128            # lane-dense padded hidden width
OUT_W = 8              # narrow output tile width (lanes 0..2 carry bnk)


def _round_up(x, m):
    return ((x + m - 1) // m) * m


def _bottlenecks_kernel(c_ref, k_ref,
                        w0c_ref, w0k_ref, b0_ref,
                        w1_ref, b1_ref, w2_ref, b2_ref,
                        w3c_ref, b3c_ref, w3k_ref, b3k_ref,
                        out_ref):
    """Full Bottlenecks forward for one tile of rows."""
    # layer 0: two K=32 dots (same MXU passes as one K=64), no input concat.
    h = jnp.dot(c_ref[...], w0c_ref[...], preferred_element_type=jnp.float32)
    h = h + jnp.dot(k_ref[...], w0k_ref[...],
                    preferred_element_type=jnp.float32)
    h = jnp.maximum(h + b0_ref[...], 0.0)

    # layers 1..2: (tm, 128) @ (128, 128)
    for w_ref, b_ref in ((w1_ref, b1_ref), (w2_ref, b2_ref)):
        h = jnp.maximum(
            jnp.dot(h, w_ref[...], preferred_element_type=jnp.float32)
            + b_ref[...], 0.0)

    # layer 3: only the 3 bnk output columns per branch (ReLU before the sum,
    # so the two branches stay separate dots).  Lanes 3..7 are exactly zero.
    c_out = jnp.maximum(
        jnp.dot(h, w3c_ref[...], preferred_element_type=jnp.float32)
        + b3c_ref[...], 0.0)
    k_out = jnp.maximum(
        jnp.dot(h, w3k_ref[...], preferred_element_type=jnp.float32)
        + b3k_ref[...], 0.0)
    out_ref[...] = c_out + k_out


def pack_params(params):
    """Repack the 8 (W, b) pairs into the 6 lane-dense operands the kernel uses.

    Weights are stored as [in, out] (transpose of nn.Linear storage).
    Hidden layout per layer: [c (32) | bc (3) | k (32) | bk (3) | 0-pad .. 128].
    """
    D, H, W, P, OW, NB = DIMS, HID, PACKED, HID_W, OUT_W, NUM_BNKS
    f32 = jnp.float32

    # ---- layer 0: center -> cols 0..34, kp -> cols 35..69 -------------------
    w0c = jnp.zeros((D, P), f32).at[:, :H].set(params["wc0"])
    w0k = jnp.zeros((D, P), f32).at[:, H:W].set(params["wk0"])
    b0 = jnp.zeros((1, P), f32)
    b0 = b0.at[:, :H].set(params["bc0"]).at[:, H:W].set(params["bk0"])
    packed = [w0c, w0k, b0]

    # ---- layers 1..2: bnk rows of Wc/Wk duplicated into bc & bk row slots ---
    for i in (1, 2):
        wc, wk = params[f"wc{i}"], params[f"wk{i}"]   # (35, 35)
        bc, bk = params[f"bc{i}"], params[f"bk{i}"]   # (1, 35)
        w = jnp.zeros((P, P), f32)
        # center branch -> output columns 0..34
        w = w.at[:D, :H].set(wc[:D])             # c rows
        w = w.at[D:H, :H].set(wc[D:])            # bc rows (bnk)
        w = w.at[H + D:W, :H].set(wc[D:])        # bk rows (bnk)
        # kp branch -> output columns 35..69
        w = w.at[H:H + D, H:W].set(wk[:D])       # k rows
        w = w.at[D:H, H:W].set(wk[D:])           # bc rows (bnk)
        w = w.at[H + D:W, H:W].set(wk[D:])       # bk rows (bnk)
        b = jnp.zeros((1, P), f32)
        b = b.at[:, :H].set(bc).at[:, H:W].set(bk)
        packed += [w, b]

    # ---- layer 3: keep only the bnk output columns, placed in lanes 0..2 ----
    wc, wk = params["wc3"], params["wk3"]
    bc, bk = params["bc3"], params["bk3"]
    w3c = jnp.zeros((P, OW), f32)
    w3c = w3c.at[:D, :NB].set(wc[:D, D:])        # c rows
    w3c = w3c.at[D:H, :NB].set(wc[D:, D:])       # bc rows (bnk)
    w3c = w3c.at[H + D:W, :NB].set(wc[D:, D:])   # bk rows (bnk)
    b3c = jnp.zeros((1, OW), f32).at[:, :NB].set(bc[:, D:])
    w3k = jnp.zeros((P, OW), f32)
    w3k = w3k.at[H:H + D, :NB].set(wk[:D, D:])   # k rows
    w3k = w3k.at[D:H, :NB].set(wk[D:, D:])       # bc rows (bnk)
    w3k = w3k.at[H + D:W, :NB].set(wk[D:, D:])   # bk rows (bnk)
    b3k = jnp.zeros((1, OW), f32).at[:, :NB].set(bk[:, D:])
    packed += [w3c, b3c, w3k, b3k]
    return packed


@functools.partial(jax.jit, static_argnames=("tm",))
def bottlenecks_forward(center, kp, packed, *, tm=8192):
    """center, kp: [B, S, DIMS] f32. Returns bottlenecks [B, S, NUM_BNKS]."""
    B, S, D = center.shape
    assert D == DIMS and kp.shape == center.shape
    M = B * S

    # Two direct row streams — no concat, no pad copy.  Pallas masks the ragged
    # final block when tm_eff does not divide M.
    c2 = center.reshape(M, D)
    k2 = kp.reshape(M, D)

    tm_eff = min(tm, _round_up(M, 8))      # multiple of 8 sublanes
    grid = (pl.cdiv(M, tm_eff),)

    row_spec = pl.BlockSpec((tm_eff, D), lambda i: (i, 0))
    full_spec = lambda p: pl.BlockSpec(p.shape, lambda i: (0, 0))
    in_specs = [row_spec, row_spec] + [full_spec(p) for p in packed]

    out = pl.pallas_call(
        _bottlenecks_kernel,
        out_shape=jax.ShapeDtypeStruct((M, OUT_W), jnp.float32),
        grid=grid,
        in_specs=in_specs,
        out_specs=pl.BlockSpec((tm_eff, OUT_W), lambda i: (i, 0)),
        compiler_params=pltpu.CompilerParams(
            dimension_semantics=("parallel",),
            vmem_limit_bytes=48 * 1024 * 1024),
    )(c2, k2, *packed)

    # lanes 3..7 of the kernel output are exactly zero; keep lanes 0..2.
    return out[:, :NUM_BNKS].reshape(B, S, NUM_BNKS)


def init_params(key):
    """Deterministic synthetic weights. W stored as [in, out], bias as [1, out]."""
    params = {}
    for i in range(NUM_LAYERS):
        in_dim = DIMS if i == 0 else HID
        for branch in ("c", "k"):
            key, kw, kb = jax.random.split(key, 3)
            params[f"w{branch}{i}"] = (
                jax.random.normal(kw, (in_dim, HID), jnp.float32) * 0.1)
            params[f"b{branch}{i}"] = (
                jax.random.normal(kb, (1, HID), jnp.float32) * 0.1)
    return params


def reference_forward(center, kp, params):
    """Pure-JAX reference of the PyTorch forward (dropout = identity)."""
    def lin_relu(x, w, b):
        return jax.nn.relu(x @ w + b)

    def cut(x):
        return x[:, :, :DIMS], x[:, :, -NUM_BNKS:]

    c, bc = cut(lin_relu(center, params["wc0"], params["bc0"]))
    k, bk = cut(lin_relu(kp, params["wk0"], params["bk0"]))
    bnk = bc + bk
    for i in range(1, NUM_LAYERS):
        c_in = jnp.concatenate([c, bnk], axis=-1)
        c, bc = cut(lin_relu(c_in, params[f"wc{i}"], params[f"bc{i}"]))
        k_in = jnp.concatenate([k, bnk], axis=-1)
        k, bk = cut(lin_relu(k_in, params[f"wk{i}"], params[f"bk{i}"]))
        bnk = bc + bk
    return bnk


if __name__ == "__main__":
    key = jax.random.PRNGKey(0)
    kparams, kc, kk = jax.random.split(key, 3)

    B, S = 2, 8
    params = init_params(kparams)
    center = jax.random.normal(kc, (B, S, DIMS), jnp.float32)
    kp = jax.random.normal(kk, (B, S, DIMS), jnp.float32)

    packed = pack_params(params)
    out = bottlenecks_forward(center, kp, packed)
    out = jax.block_until_ready(out)

    ref = reference_forward(center, kp, params)
    assert out.shape == (B, S, NUM_BNKS)
    assert jnp.allclose(out, ref, atol=1e-4, rtol=1e-4), "mismatch vs reference"

    print("KERNEL_OK")
</pallas_src>

<mosaic_0001>
module attributes {stable_mosaic.version = 11 : i64} {
  func.func @_bottlenecks_kernel(%arg0: i32, %arg1: memref<16x32xf32, #tpu.memory_space<vmem>>, %arg2: memref<16x32xf32, #tpu.memory_space<vmem>>, %arg3: memref<32x128xf32, #tpu.memory_space<vmem>>, %arg4: memref<32x128xf32, #tpu.memory_space<vmem>>, %arg5: memref<1x128xf32, #tpu.memory_space<vmem>>, %arg6: memref<128x128xf32, #tpu.memory_space<vmem>>, %arg7: memref<1x128xf32, #tpu.memory_space<vmem>>, %arg8: memref<128x128xf32, #tpu.memory_space<vmem>>, %arg9: memref<1x128xf32, #tpu.memory_space<vmem>>, %arg10: memref<128x8xf32, #tpu.memory_space<vmem>>, %arg11: memref<1x8xf32, #tpu.memory_space<vmem>>, %arg12: memref<128x8xf32, #tpu.memory_space<vmem>>, %arg13: memref<1x8xf32, #tpu.memory_space<vmem>>, %arg14: memref<16x8xf32, #tpu.memory_space<vmem>>) attributes {dimension_semantics = [#tpu.dimension_semantics<parallel>], iteration_bounds = array<i64: 1>, scalar_prefetch = 0 : i64, scratch_operands = 0 : i64, tpu.core_type = #tpu.core_type<tc>, window_params = [{transform_indices = @transform_0, window_bounds = array<i64: 16, 32>}, {transform_indices = @transform_1, window_bounds = array<i64: 16, 32>}, {pipeline_mode = #tpu.pipeline_mode<synchronous>, transform_indices = @transform_2, window_bounds = array<i64: 32, 128>}, {pipeline_mode = #tpu.pipeline_mode<synchronous>, transform_indices = @transform_3, window_bounds = array<i64: 32, 128>}, {pipeline_mode = #tpu.pipeline_mode<synchronous>, transform_indices = @transform_4, window_bounds = array<i64: 1, 128>}, {pipeline_mode = #tpu.pipeline_mode<synchronous>, transform_indices = @transform_5, window_bounds = array<i64: 128, 128>}, {pipeline_mode = #tpu.pipeline_mode<synchronous>, transform_indices = @transform_6, window_bounds = array<i64: 1, 128>}, {pipeline_mode = #tpu.pipeline_mode<synchronous>, transform_indices = @transform_7, window_bounds = array<i64: 128, 128>}, {pipeline_mode = #tpu.pipeline_mode<synchronous>, transform_indices = @transform_8, window_bounds = array<i64: 1, 128>}, {pipeline_mode = #tpu.pipeline_mode<synchronous>, transform_indices = @transform_9, window_bounds = array<i64: 128, 8>}, {pipeline_mode = #tpu.pipeline_mode<synchronous>, transform_indices = @transform_10, window_bounds = array<i64: 1, 8>}, {pipeline_mode = #tpu.pipeline_mode<synchronous>, transform_indices = @transform_11, window_bounds = array<i64: 128, 8>}, {pipeline_mode = #tpu.pipeline_mode<synchronous>, transform_indices = @transform_12, window_bounds = array<i64: 1, 8>}, {transform_indices = @transform_13, window_bounds = array<i64: 16, 8>}]} {
    %c0 = arith.constant 0 : index
    %c0_0 = arith.constant 0 : index
    %0 = vector.load %arg1[%c0, %c0_0] : memref<16x32xf32, #tpu.memory_space<vmem>>, vector<16x32xf32>
    %c0_1 = arith.constant 0 : index
    %c0_2 = arith.constant 0 : index
    %1 = vector.load %arg3[%c0_1, %c0_2] : memref<32x128xf32, #tpu.memory_space<vmem>>, vector<32x128xf32>
    %cst = arith.constant dense<0.000000e+00> : vector<16x128xf32>
    %2 = tpu.matmul %0, %1, %cst {dimension_numbers = #tpu.dot_dimension_numbers<[1], [0], [0], [1], [0, 0, 1, 1], [], []>} : vector<16x32xf32>, vector<32x128xf32>, vector<16x128xf32> -> vector<16x128xf32>
    %c0_3 = arith.constant 0 : index
    %c0_4 = arith.constant 0 : index
    %3 = vector.load %arg2[%c0_3, %c0_4] : memref<16x32xf32, #tpu.memory_space<vmem>>, vector<16x32xf32>
    %c0_5 = arith.constant 0 : index
    %c0_6 = arith.constant 0 : index
    %4 = vector.load %arg4[%c0_5, %c0_6] : memref<32x128xf32, #tpu.memory_space<vmem>>, vector<32x128xf32>
    %cst_7 = arith.constant dense<0.000000e+00> : vector<16x128xf32>
    %5 = tpu.matmul %3, %4, %cst_7 {dimension_numbers = #tpu.dot_dimension_numbers<[1], [0], [0], [1], [0, 0, 1, 1], [], []>} : vector<16x32xf32>, vector<32x128xf32>, vector<16x128xf32> -> vector<16x128xf32>
    %6 = arith.addf %2, %5 : vector<16x128xf32>
    %c0_8 = arith.constant 0 : index
    %c0_9 = arith.constant 0 : index
    %7 = vector.load %arg5[%c0_8, %c0_9] : memref<1x128xf32, #tpu.memory_space<vmem>>, vector<1x128xf32>
    %8 = vector.broadcast %7 : vector<1x128xf32> to vector<16x128xf32>
    %9 = arith.addf %6, %8 : vector<16x128xf32>
    %cst_10 = arith.constant 0.000000e+00 : f32
    %10 = vector.broadcast %cst_10 : f32 to vector<16x128xf32>
    %11 = arith.maximumf %9, %10 : vector<16x128xf32>
    %c0_11 = arith.constant 0 : index
    %c0_12 = arith.constant 0 : index
    %12 = vector.load %arg6[%c0_11, %c0_12] : memref<128x128xf32, #tpu.memory_space<vmem>>, vector<128x128xf32>
    %cst_13 = arith.constant dense<0.000000e+00> : vector<16x128xf32>
    %13 = tpu.matmul %11, %12, %cst_13 {dimension_numbers = #tpu.dot_dimension_numbers<[1], [0], [0], [1], [0, 0, 1, 1], [], []>} : vector<16x128xf32>, vector<128x128xf32>, vector<16x128xf32> -> vector<16x128xf32>
    %c0_14 = arith.constant 0 : index
    %c0_15 = arith.constant 0 : index
    %14 = vector.load %arg7[%c0_14, %c0_15] : memref<1x128xf32, #tpu.memory_space<vmem>>, vector<1x128xf32>
    %15 = vector.broadcast %14 : vector<1x128xf32> to vector<16x128xf32>
    %16 = arith.addf %13, %15 : vector<16x128xf32>
    %cst_16 = arith.constant 0.000000e+00 : f32
    %17 = vector.broadcast %cst_16 : f32 to vector<16x128xf32>
    %18 = arith.maximumf %16, %17 : vector<16x128xf32>
    %c0_17 = arith.constant 0 : index
    %c0_18 = arith.constant 0 : index
    %19 = vector.load %arg8[%c0_17, %c0_18] : memref<128x128xf32, #tpu.memory_space<vmem>>, vector<128x128xf32>
    %cst_19 = arith.constant dense<0.000000e+00> : vector<16x128xf32>
    %20 = tpu.matmul %18, %19, %cst_19 {dimension_numbers = #tpu.dot_dimension_numbers<[1], [0], [0], [1], [0, 0, 1, 1], [], []>} : vector<16x128xf32>, vector<128x128xf32>, vector<16x128xf32> -> vector<16x128xf32>
    %c0_20 = arith.constant 0 : index
    %c0_21 = arith.constant 0 : index
    %21 = vector.load %arg9[%c0_20, %c0_21] : memref<1x128xf32, #tpu.memory_space<vmem>>, vector<1x128xf32>
    %22 = vector.broadcast %21 : vector<1x128xf32> to vector<16x128xf32>
    %23 = arith.addf %20, %22 : vector<16x128xf32>
    %cst_22 = arith.constant 0.000000e+00 : f32
    %24 = vector.broadcast %cst_22 : f32 to vector<16x128xf32>
    %25 = arith.maximumf %23, %24 : vector<16x128xf32>
    %c0_23 = arith.constant 0 : index
    %c0_24 = arith.constant 0 : index
    %26 = vector.load %arg10[%c0_23, %c0_24] : memref<128x8xf32, #tpu.memory_space<vmem>>, vector<128x8xf32>
    %cst_25 = arith.constant dense<0.000000e+00> : vector<16x8xf32>
    %27 = tpu.matmul %25, %26, %cst_25 {dimension_numbers = #tpu.dot_dimension_numbers<[1], [0], [0], [1], [0, 0, 1, 1], [], []>} : vector<16x128xf32>, vector<128x8xf32>, vector<16x8xf32> -> vector<16x8xf32>
    %c0_26 = arith.constant 0 : index
    %c0_27 = arith.constant 0 : index
    %28 = vector.load %arg11[%c0_26, %c0_27] : memref<1x8xf32, #tpu.memory_space<vmem>>, vector<1x8xf32>
    %29 = vector.broadcast %28 : vector<1x8xf32> to vector<16x8xf32>
    %30 = arith.addf %27, %29 : vector<16x8xf32>
    %cst_28 = arith.constant 0.000000e+00 : f32
    %31 = vector.broadcast %cst_28 : f32 to vector<16x8xf32>
    %32 = arith.maximumf %30, %31 : vector<16x8xf32>
    %c0_29 = arith.constant 0 : index
    %c0_30 = arith.constant 0 : index
    %33 = vector.load %arg12[%c0_29, %c0_30] : memref<128x8xf32, #tpu.memory_space<vmem>>, vector<128x8xf32>
    %cst_31 = arith.constant dense<0.000000e+00> : vector<16x8xf32>
    %34 = tpu.matmul %25, %33, %cst_31 {dimension_numbers = #tpu.dot_dimension_numbers<[1], [0], [0], [1], [0, 0, 1, 1], [], []>} : vector<16x128xf32>, vector<128x8xf32>, vector<16x8xf32> -> vector<16x8xf32>
    %c0_32 = arith.constant 0 : index
    %c0_33 = arith.constant 0 : index
    %35 = vector.load %arg13[%c0_32, %c0_33] : memref<1x8xf32, #tpu.memory_space<vmem>>, vector<1x8xf32>
    %36 = vector.broadcast %35 : vector<1x8xf32> to vector<16x8xf32>
    %37 = arith.addf %34, %36 : vector<16x8xf32>
    %cst_34 = arith.constant 0.000000e+00 : f32
    %38 = vector.broadcast %cst_34 : f32 to vector<16x8xf32>
    %39 = arith.maximumf %37, %38 : vector<16x8xf32>
    %40 = arith.addf %32, %39 : vector<16x8xf32>
    %c0_35 = arith.constant 0 : index
    %c0_36 = arith.constant 0 : index
    %41 = vector.load %arg14[%c0_35, %c0_36] : memref<16x8xf32, #tpu.memory_space<vmem>>, vector<16x8xf32>
    tpu.vector_store %arg14[%c0_35, %c0_36], %40 {strides = array<i32>} : memref<16x8xf32, #tpu.memory_space<vmem>>, vector<16x8xf32>,
    return
  }
  func.func @transform_0(%arg0: i32) -> (i32, i32) {
    %c0_i32 = arith.constant 0 : i32
    %c0_i32_0 = arith.constant 0 : i32
    return %arg0, %c0_i32 : i32, i32
  }
  func.func @transform_1(%arg0: i32) -> (i32, i32) {
    %c0_i32 = arith.constant 0 : i32
    %c0_i32_0 = arith.constant 0 : i32
    return %arg0, %c0_i32 : i32, i32
  }
  func.func @transform_2(%arg0: i32) -> (i32, i32) {
    %c0_i32 = arith.constant 0 : i32
    %c0_i32_0 = arith.constant 0 : i32
    %c0_i32_1 = arith.constant 0 : i32
    return %c0_i32, %c0_i32_0 : i32, i32
  }
  func.func @transform_3(%arg0: i32) -> (i32, i32) {
    %c0_i32 = arith.constant 0 : i32
    %c0_i32_0 = arith.constant 0 : i32
    %c0_i32_1 = arith.constant 0 : i32
    return %c0_i32, %c0_i32_0 : i32, i32
  }
  func.func @transform_4(%arg0: i32) -> (i32, i32) {
    %c0_i32 = arith.constant 0 : i32
    %c0_i32_0 = arith.constant 0 : i32
    %c0_i32_1 = arith.constant 0 : i32
    return %c0_i32, %c0_i32_0 : i32, i32
  }
  func.func @transform_5(%arg0: i32) -> (i32, i32) {
    %c0_i32 = arith.constant 0 : i32
    %c0_i32_0 = arith.constant 0 : i32
    %c0_i32_1 = arith.constant 0 : i32
    return %c0_i32, %c0_i32_0 : i32, i32
  }
  func.func @transform_6(%arg0: i32) -> (i32, i32) {
    %c0_i32 = arith.constant 0 : i32
    %c0_i32_0 = arith.constant 0 : i32
    %c0_i32_1 = arith.constant 0 : i32
    return %c0_i32, %c0_i32_0 : i32, i32
  }
  func.func @transform_7(%arg0: i32) -> (i32, i32) {
    %c0_i32 = arith.constant 0 : i32
    %c0_i32_0 = arith.constant 0 : i32
    %c0_i32_1 = arith.constant 0 : i32
    return %c0_i32, %c0_i32_0 : i32, i32
  }
  func.func @transform_8(%arg0: i32) -> (i32, i32) {
    %c0_i32 = arith.constant 0 : i32
    %c0_i32_0 = arith.constant 0 : i32
    %c0_i32_1 = arith.constant 0 : i32
    return %c0_i32, %c0_i32_0 : i32, i32
  }
  func.func @transform_9(%arg0: i32) -> (i32, i32) {
    %c0_i32 = arith.constant 0 : i32
    %c0_i32_0 = arith.constant 0 : i32
    %c0_i32_1 = arith.constant 0 : i32
    return %c0_i32, %c0_i32_0 : i32, i32
  }
  func.func @transform_10(%arg0: i32) -> (i32, i32) {
    %c0_i32 = arith.constant 0 : i32
    %c0_i32_0 = arith.constant 0 : i32
    %c0_i32_1 = arith.constant 0 : i32
    return %c0_i32, %c0_i32_0 : i32, i32
  }
  func.func @transform_11(%arg0: i32) -> (i32, i32) {
    %c0_i32 = arith.constant 0 : i32
    %c0_i32_0 = arith.constant 0 : i32
    %c0_i32_1 = arith.constant 0 : i32
    return %c0_i32, %c0_i32_0 : i32, i32
  }
  func.func @transform_12(%arg0: i32) -> (i32, i32) {
    %c0_i32 = arith.constant 0 : i32
    %c0_i32_0 = arith.constant 0 : i32
    %c0_i32_1 = arith.constant 0 : i32
    return %c0_i32, %c0_i32_0 : i32, i32
  }
  func.func @transform_13(%arg0: i32) -> (i32, i32) {
    %c0_i32 = arith.constant 0 : i32
    %c0_i32_0 = arith.constant 0 : i32
    return %arg0, %c0_i32 : i32, i32
  }
}

</mosaic_0001>

<llo_original>
// kernel: bottlenecks_forward.1
$region0: #{bottlenecks_forward.1}
  #allocation0 [shape = 'u32[]', space=smem, size = 0x4, offset = 0x4, fixed_abs, tag = 'smem constant byte address 0x4 - core index']
  #allocation1 [shape = 'u32[144,128]{1,0:T(1,128)}', space=vmem, size = 0x12000, scoped, tag = 'internal scratch']
  %s0 = inlined_call_operand.vmem [shape: f32[16,32], index: 0, kind: input, shape index: {}]
  %s1 = inlined_call_operand.hbm [shape: f32[16,32], index: 1, kind: input, shape index: {}]
  %s2 = inlined_call_operand.hbm [shape: f32[32,128], index: 2, kind: input, shape index: {}]
  %s3 = inlined_call_operand.hbm [shape: f32[32,128], index: 3, kind: input, shape index: {}]
  %s4 = inlined_call_operand.hbm [shape: f32[1,128], index: 4, kind: input, shape index: {}]
  %s5 = inlined_call_operand.vmem [shape: f32[128,128], index: 5, kind: input, shape index: {}]
  %s6 = inlined_call_operand.hbm [shape: f32[1,128], index: 6, kind: input, shape index: {}]
  %s7 = inlined_call_operand.vmem [shape: f32[128,128], index: 7, kind: input, shape index: {}]
  %s8 = inlined_call_operand.vmem [shape: f32[1,128], index: 8, kind: input, shape index: {}]
  %s9 = inlined_call_operand.vmem [shape: f32[128,8], index: 9, kind: input, shape index: {}]
  %s10 = inlined_call_operand.vmem [shape: f32[1,8], index: 10, kind: input, shape index: {}]
  %s11 = inlined_call_operand.vmem [shape: f32[128,8], index: 11, kind: input, shape index: {}]
  %s12 = inlined_call_operand.vmem [shape: f32[1,8], index: 12, kind: input, shape index: {}]
  %s13 = inlined_call_operand.vmem [shape: f32[16,8], index: 13, kind: output, shape index: {}]
  %s14 = sld [smem:[#allocation0]]
  $region82: #{bottlenecks_forward.1} parent=0
    _
  %s16 = ssub.s32 1, %s14
  %s17 = scalar_select 0, %s16, %s14
  $region1: #{bottlenecks_forward.1} parent=0
    #allocation2 [shape = 'u8[8192]{0}', space=vmem, size = 0x2000, scoped, tag = 'input window, operand 1, single buffered']
    #allocation3 [shape = 's32[1]{0}', space=sflag, size = 0x4, scoped, tag = 'scoped memory for bottlenecks_forward.1']
    #allocation4 [shape = 'u8[16384]{0}', space=vmem, size = 0x4000, scoped, tag = 'input window, operand 2, single buffered']
    #allocation5 [shape = 's32[1]{0}', space=sflag, size = 0x4, scoped, tag = 'scoped memory for bottlenecks_forward.1']
    #allocation6 [shape = 'u8[16384]{0}', space=vmem, size = 0x4000, scoped, tag = 'input window, operand 3, single buffered']
    #allocation7 [shape = 'u8[512]{0}', space=vmem, size = 0x400, scoped, tag = 'input window, operand 4, single buffered']
    #allocation8 [shape = 's32[1]{0}', space=sflag, size = 0x4, scoped, tag = 'scoped memory for bottlenecks_forward.1']
    #allocation9 [shape = 'u8[512]{0}', space=vmem, size = 0x400, scoped, tag = 'input window, operand 6, single buffered']
    %18 = vsyncpa [#allocation3], 0
    %19 = vsyncpa [#allocation5], 0
    %20 = vsyncpa [#allocation8], 0
    // Predicated region
    $region2: #{bottlenecks_forward.1} parent=1 // pred_check
      _
    $region3: #{bottlenecks_forward.1} parent=1 // pred_check_branch
      %22 = sbr.rel (0) target = $region5
    $region4: #{bottlenecks_forward.1} parent=1 // pred_region
      _
    $region5: #{bottlenecks_forward.1} parent=1 // pred_fallthru
      _
    // Predicated region
    $region6: #{bottlenecks_forward.1} parent=1 // pred_check
      _
    $region7: #{bottlenecks_forward.1} parent=1 // pred_check_branch
      %24 = sbr.rel (0) target = $region9
    $region8: #{bottlenecks_forward.1} parent=1 // pred_region
      %s26 = ssub.s32 256, 256
      %27 = vsyncadd [#allocation3], %s26
      %s28 = sshll.u32 [#allocation2], 4
      %s29 = int_to_ptr.vmem [resolvable:$true] %s28
      %34 = dma.hbm_to_vmem [thread:$0]  %s1, 256, %s29, [#allocation3], 128, 128, 8
    $region9: #{bottlenecks_forward.1} parent=1 // pred_fallthru
      _
    // Predicated region
    $region10: #{bottlenecks_forward.1} parent=1 // pred_check
      _
    $region11: #{bottlenecks_forward.1} parent=1 // pred_check_branch
      %36 = sbr.rel (0) target = $region13
    $region12: #{bottlenecks_forward.1} parent=1 // pred_region
      %s38 = ssub.s32 512, 512
      %39 = vsyncadd [#allocation5], %s38
      %s40 = sshll.u32 [#allocation4], 4
      %s41 = int_to_ptr.vmem [resolvable:$true] %s40
      %46 = dma.hbm_to_vmem [thread:$0]  %s2, 512, %s41, [#allocation5], 128, 128, 8
    $region13: #{bottlenecks_forward.1} parent=1 // pred_fallthru
      _
    // Predicated region
    $region14: #{bottlenecks_forward.1} parent=1 // pred_check
      _
    $region15: #{bottlenecks_forward.1} parent=1 // pred_check_branch
      %48 = sbr.rel (0) target = $region17
    $region16: #{bottlenecks_forward.1} parent=1 // pred_region
      %s50 = ssub.s32 512, 512
      %51 = vsyncadd [#allocation5], %s50
      %s52 = sshll.u32 [#allocation6], 4
      %s53 = int_to_ptr.vmem [resolvable:$true] %s52
      %58 = dma.hbm_to_vmem [thread:$0]  %s3, 512, %s53, [#allocation5], 128, 128, 8
    $region17: #{bottlenecks_forward.1} parent=1 // pred_fallthru
      _
    // Predicated region
    $region18: #{bottlenecks_forward.1} parent=1 // pred_check
      _
    $region19: #{bottlenecks_forward.1} parent=1 // pred_check_branch
      %60 = sbr.rel (0) target = $region21
    $region20: #{bottlenecks_forward.1} parent=1 // pred_region
      %s62 = ssub.s32 16, 16
      %63 = vsyncadd [#allocation8], %s62
      %s65 = sshll.u32 [#allocation7], 4
      %s66 = int_to_ptr.vmem [resolvable:$true] %s65
      %68 = dma.hbm_to_vmem [thread:$0]  %s4, 16, %s66, [#allocation8]
    $region21: #{bottlenecks_forward.1} parent=1 // pred_fallthru
      _
    // Predicated region
    $region22: #{bottlenecks_forward.1} parent=1 // pred_check
      _
    $region23: #{bottlenecks_forward.1} parent=1 // pred_check_branch
      %70 = sbr.rel (0) target = $region25
    $region24: #{bottlenecks_forward.1} parent=1 // pred_region
      _
    $region25: #{bottlenecks_forward.1} parent=1 // pred_fallthru
      _
    // Predicated region
    $region26: #{bottlenecks_forward.1} parent=1 // pred_check
      _
    $region27: #{bottlenecks_forward.1} parent=1 // pred_check_branch
      %72 = sbr.rel (0) target = $region29
    $region28: #{bottlenecks_forward.1} parent=1 // pred_region
      %s74 = ssub.s32 16, 16
      %75 = vsyncadd [#allocation8], %s74
      %s77 = sshll.u32 [#allocation9], 4
      %s78 = int_to_ptr.vmem [resolvable:$true] %s77
      %80 = dma.hbm_to_vmem [thread:$0]  %s6, 16, %s78, [#allocation8]
    $region29: #{bottlenecks_forward.1} parent=1 // pred_fallthru
      _
    // Predicated region
    $region30: #{bottlenecks_forward.1} parent=1 // pred_check
      _
    $region31: #{bottlenecks_forward.1} parent=1 // pred_check_branch
      %82 = sbr.rel (0) target = $region33
    $region32: #{bottlenecks_forward.1} parent=1 // pred_region
      _
    $region33: #{bottlenecks_forward.1} parent=1 // pred_fallthru
      _
    // Predicated region
    $region34: #{bottlenecks_forward.1} parent=1 // pred_check
      _
    $region35: #{bottlenecks_forward.1} parent=1 // pred_check_branch
      %84 = sbr.rel (0) target = $region37
    $region36: #{bottlenecks_forward.1} parent=1 // pred_region
      _
    $region37: #{bottlenecks_forward.1} parent=1 // pred_fallthru
      _
    // Predicated region
    $region38: #{bottlenecks_forward.1} parent=1 // pred_check
      _
    $region39: #{bottlenecks_forward.1} parent=1 // pred_check_branch
      %86 = sbr.rel (0) target = $region41
    $region40: #{bottlenecks_forward.1} parent=1 // pred_region
      _
    $region41: #{bottlenecks_forward.1} parent=1 // pred_fallthru
      _
    // Predicated region
    $region42: #{bottlenecks_forward.1} parent=1 // pred_check
      _
    $region43: #{bottlenecks_forward.1} parent=1 // pred_check_branch
      %88 = sbr.rel (0) target = $region45
    $region44: #{bottlenecks_forward.1} parent=1 // pred_region
      _
    $region45: #{bottlenecks_forward.1} parent=1 // pred_fallthru
      _
    // Predicated region
    $region46: #{bottlenecks_forward.1} parent=1 // pred_check
      _
    $region47: #{bottlenecks_forward.1} parent=1 // pred_check_branch
      %90 = sbr.rel (0) target = $region49
    $region48: #{bottlenecks_forward.1} parent=1 // pred_region
      _
    $region49: #{bottlenecks_forward.1} parent=1 // pred_fallthru
      _
    // Predicated region
    $region50: #{bottlenecks_forward.1} parent=1 // pred_check
      _
    $region51: #{bottlenecks_forward.1} parent=1 // pred_check_branch
      %92 = sbr.rel (0) target = $region53
    $region52: #{bottlenecks_forward.1} parent=1 // pred_region
      _
    $region53: #{bottlenecks_forward.1} parent=1 // pred_fallthru
      _
    // Predicated region
    $region54: #{bottlenecks_forward.1} parent=1 // pred_check
      _
    $region55: #{bottlenecks_forward.1} parent=1 // pred_check_branch
      %94 = sbr.rel (0) target = $region57
    $region56: #{bottlenecks_forward.1} parent=1 // pred_region
      %95 = dma.done [#allocation3], 256
    $region57: #{bottlenecks_forward.1} parent=1 // pred_fallthru
      _
    // Predicated region
    $region58: #{bottlenecks_forward.1} parent=1 // pred_check
      _
    $region59: #{bottlenecks_forward.1} parent=1 // pred_check_branch
      %97 = sbr.rel (0) target = $region61
    $region60: #{bottlenecks_forward.1} parent=1 // pred_region
      %98 = dma.done [#allocation5], 512
    $region61: #{bottlenecks_forward.1} parent=1 // pred_fallthru
      _
    // Predicated region
    $region62: #{bottlenecks_forward.1} parent=1 // pred_check
      _
    $region63: #{bottlenecks_forward.1} parent=1 // pred_check_branch
      %100 = sbr.rel (0) target = $region65
    $region64: #{bottlenecks_forward.1} parent=1 // pred_region
      %101 = dma.done [#allocation5], 512
    $region65: #{bottlenecks_forward.1} parent=1 // pred_fallthru
      _
    // Predicated region
    $region66: #{bottlenecks_forward.1} parent=1 // pred_check
      _
    $region67: #{bottlenecks_forward.1} parent=1 // pred_check_branch
      %103 = sbr.rel (0) target = $region69
    $region68: #{bottlenecks_forward.1} parent=1 // pred_region
      %104 = dma.done [#allocation8], 16
    $region69: #{bottlenecks_forward.1} parent=1 // pred_fallthru
      _
    // Predicated region
    $region70: #{bottlenecks_forward.1} parent=1 // pred_check
      _
    $region71: #{bottlenecks_forward.1} parent=1 // pred_check_branch
      %106 = sbr.rel (0) target = $region73
    $region72: #{bottlenecks_forward.1} parent=1 // pred_region
      %107 = dma.done [#allocation8], 16
    $region73: #{bottlenecks_forward.1} parent=1 // pred_fallthru
      _
    %v108 = vld [vmem:[%s0] sm:$0xff]
    %v109 = vld [vmem:[%s0 + $0x8] sm:$0xff]
    %v110 = vld [vmem:[#allocation4] sm:$0xff]
    %v111 = vld [vmem:[#allocation4 + $0x8] sm:$0xff]
    %v112 = vld [vmem:[#allocation4 + $0x10] sm:$0xff]
    %v113 = vld [vmem:[#allocation4 + $0x18] sm:$0xff]
    %v114 = vld [vmem:[#allocation2] sm:$0xff]
    %v115 = vld [vmem:[#allocation2 + $0x8] sm:$0xff]
    %v116 = vld [vmem:[#allocation6] sm:$0xff]
    %v117 = vld [vmem:[#allocation6 + $0x8] sm:$0xff]
    %v118 = vld [vmem:[#allocation6 + $0x10] sm:$0xff]
    %v119 = vld [vmem:[#allocation6 + $0x18] sm:$0xff]
    %vm120 = vcmask 261120
    %v122 = vsel %vm120, %v114, 0
    %v125 = vsel %vm120, %v115, 0
    %127 = vmatprep.subr.mxu0 0.0
    %128 = vmatpush1.msra.mxu0 0.0
    %129 = vmatprep.subr.mxu0 0.0
    %130 = vmatpush1.msra.mxu0 0.0
    %131 = vmatprep.subr.mxu0 0.0
    %132 = vmatpush1.msra.mxu0 0.0
    %133 = vmatprep.subr.mxu0 0.0
    %134 = vmatpush1.msra.mxu0 0.0
    %135 = vmatprep.subr.mxu0 0.0
    %136 = vmatpush1.msra.mxu0 0.0
    %137 = vmatprep.subr.mxu0 0.0
    %138 = vmatpush1.msra.mxu0 0.0
    %139 = vmatprep.subr.mxu0 0.0
    %140 = vmatpush1.msra.mxu0 0.0
    %141 = vmatprep.subr.mxu0 0.0
    %142 = vmatpush1.msra.mxu0 0.0
    %143 = vmatprep.subr.mxu0 0.0
    %144 = vmatpush1.msra.mxu0 0.0
    %145 = vmatprep.subr.mxu0 0.0
    %146 = vmatpush1.msra.mxu0 0.0
    %147 = vmatprep.subr.mxu0 0.0
    %148 = vmatpush1.msra.mxu0 0.0
    %149 = vmatprep.subr.mxu0 0.0
    %150 = vmatpush1.msra.mxu0 0.0
    %151 = vmatprep.subr.mxu0 0.0
    %152 = vmatpush1.msra.mxu0 %v119
    %153 = vmatprep.subr.mxu0 0.0
    %154 = vmatpush1.msra.mxu0 %v118
    %155 = vmatprep.subr.mxu0 0.0
    %156 = vmatpush1.msra.mxu0 %v117
    %157 = vmatprep.subr.mxu0 0.0
    %158 = vmatpush1.msra.mxu0 %v116
    %159 = vmatprep.subr.mxu0 0.0
    %160 = vmatpush2.msra.mxu0 0.0
    %161 = vmatprep.subr.mxu0 0.0
    %162 = vmatpush2.msra.mxu0 0.0
    %163 = vmatprep.subr.mxu0 0.0
    %164 = vmatpush2.msra.mxu0 0.0
    %165 = vmatprep.subr.mxu0 0.0
    %166 = vmatpush2.msra.mxu0 0.0
    %167 = vmatprep.subr.mxu0 0.0
    %168 = vmatpush2.msra.mxu0 0.0
    %169 = vmatprep.subr.mxu0 0.0
    %170 = vmatpush2.msra.mxu0 0.0
    %171 = vmatprep.subr.mxu0 0.0
    %172 = vmatpush2.msra.mxu0 0.0
    %173 = vmatprep.subr.mxu0 0.0
    %174 = vmatpush2.msra.mxu0 0.0
    %175 = vmatprep.subr.mxu0 0.0
    %176 = vmatpush2.msra.mxu0 0.0
    %177 = vmatprep.subr.mxu0 0.0
    %178 = vmatpush2.msra.mxu0 0.0
    %179 = vmatprep.subr.mxu0 0.0
    %180 = vmatpush2.msra.mxu0 0.0
    %181 = vmatprep.subr.mxu0 0.0
    %182 = vmatpush2.msra.mxu0 0.0
    %183 = vmatprep.subr.mxu0 0.0
    %184 = vmatpush2.msra.mxu0 0.0
    %185 = vmatprep.subr.mxu0 0.0
    %186 = vmatpush2.msra.mxu0 0.0
    %187 = vmatprep.subr.mxu0 0.0
    %188 = vmatpush2.msra.mxu0 0.0
    %189 = vmatprep.subr.mxu0 0.0
    %190 = vmatpush2.msra.mxu0 0.0
    %191 = vmatprep.mubr.f32.mxu0 0.0
    %192 = vmatmul.mubr.f32.gmra.mxu0 %v122
    %v193 = vpop.f32.mrf.mxu0
    %v194 = vadd.f32 0.0, %v193
    %v195 = vpop.f32.mrf.mxu0
    %196 = vmatprep.mubr.f32.mxu0 0.0
    %197 = vmatmul.mubr.f32.gmra.mxu0 %v125
    %v198 = vpop.f32.mrf.mxu0
    %v199 = vadd.f32 0.0, %v198
    %v200 = vpop.f32.mrf.mxu0
    %201 = vdwg.mxu0
    %v203 = vsel %vm120, %v108, 0
    %v206 = vsel %vm120, %v109, 0
    %208 = vmatprep.subr.mxu0 0.0
    %209 = vmatpush1.msra.mxu0 0.0
    %210 = vmatprep.subr.mxu0 0.0
    %211 = vmatpush1.msra.mxu0 0.0
    %212 = vmatprep.subr.mxu0 0.0
    %213 = vmatpush1.msra.mxu0 0.0
    %214 = vmatprep.subr.mxu0 0.0
    %215 = vmatpush1.msra.mxu0 0.0
    %216 = vmatprep.subr.mxu0 0.0
    %217 = vmatpush1.msra.mxu0 0.0
    %218 = vmatprep.subr.mxu0 0.0
    %219 = vmatpush1.msra.mxu0 0.0
    %220 = vmatprep.subr.mxu0 0.0
    %221 = vmatpush1.msra.mxu0 0.0
    %222 = vmatprep.subr.mxu0 0.0
    %223 = vmatpush1.msra.mxu0 0.0
    %224 = vmatprep.subr.mxu0 0.0
    %225 = vmatpush1.msra.mxu0 0.0
    %226 = vmatprep.subr.mxu0 0.0
    %227 = vmatpush1.msra.mxu0 0.0
    %228 = vmatprep.subr.mxu0 0.0
    %229 = vmatpush1.msra.mxu0 0.0
    %230 = vmatprep.subr.mxu0 0.0
    %231 = vmatpush1.msra.mxu0 0.0
    %232 = vmatprep.subr.mxu0 0.0
    %233 = vmatpush1.msra.mxu0 %v113
    %234 = vmatprep.subr.mxu0 0.0
    %235 = vmatpush1.msra.mxu0 %v112
    %236 = vmatprep.subr.mxu0 0.0
    %237 = vmatpush1.msra.mxu0 %v111
    %238 = vmatprep.subr.mxu0 0.0
    %239 = vmatpush1.msra.mxu0 %v110
    %240 = vmatprep.subr.mxu0 0.0
    %241 = vmatpush2.msra.mxu0 0.0
    %242 = vmatprep.subr.mxu0 0.0
    %243 = vmatpush2.msra.mxu0 0.0
    %244 = vmatprep.subr.mxu0 0.0
    %245 = vmatpush2.msra.mxu0 0.0
    %246 = vmatprep.subr.mxu0 0.0
    %247 = vmatpush2.msra.mxu0 0.0
    %248 = vmatprep.subr.mxu0 0.0
    %249 = vmatpush2.msra.mxu0 0.0
    %250 = vmatprep.subr.mxu0 0.0
    %251 = vmatpush2.msra.mxu0 0.0
    %252 = vmatprep.subr.mxu0 0.0
    %253 = vmatpush2.msra.mxu0 0.0
    %254 = vmatprep.subr.mxu0 0.0
    %255 = vmatpush2.msra.mxu0 0.0
    %256 = vmatprep.subr.mxu0 0.0
    %257 = vmatpush2.msra.mxu0 0.0
    %258 = vmatprep.subr.mxu0 0.0
    %259 = vmatpush2.msra.mxu0 0.0
    %260 = vmatprep.subr.mxu0 0.0
    %261 = vmatpush2.msra.mxu0 0.0
    %262 = vmatprep.subr.mxu0 0.0
    %263 = vmatpush2.msra.mxu0 0.0
    %264 = vmatprep.subr.mxu0 0.0
    %265 = vmatpush2.msra.mxu0 0.0
    %266 = vmatprep.subr.mxu0 0.0
    %267 = vmatpush2.msra.mxu0 0.0
    %268 = vmatprep.subr.mxu0 0.0
    %269 = vmatpush2.msra.mxu0 0.0
    %270 = vmatprep.subr.mxu0 0.0
    %271 = vmatpush2.msra.mxu0 0.0
    %272 = vmatprep.mubr.f32.mxu0 0.0
    %273 = vmatmul.mubr.f32.gmra.mxu0 %v203
    %v274 = vpop.f32.mrf.mxu0
    %v275 = vadd.f32 %v194, %v274
    %v276 = vpop.f32.mrf.mxu0
    %277 = vmatprep.mubr.f32.mxu0 0.0
    %278 = vmatmul.mubr.f32.gmra.mxu0 %v206
    %v279 = vpop.f32.mrf.mxu0
    %v280 = vadd.f32 %v199, %v279
    %v281 = vpop.f32.mrf.mxu0
    %282 = vdwg.mxu0
    %v283 = vld [vmem:[#allocation7] sm:$0x1]
    %v285 = vlaneseq
    %v286 = vshrl.u32 %v285, 7
    %v287 = vsub.s32 0, %v286
    %v288 = vrot.slane %v283, %v287
    %v290 = vadd.f32 %v275, %v288
    %v291 = vadd.f32 %v280, %v288
    %v292 = vmax.f32 %v290, 0.0
    %v293 = vmax.f32 %v291, 0.0
    %v294 = vld [vmem:[%s5] sm:$0xff]
    %v295 = vld [vmem:[%s5 + $0x8] sm:$0xff]
    %v296 = vld [vmem:[%s5 + $0x10] sm:$0xff]
    %v297 = vld [vmem:[%s5 + $0x18] sm:$0xff]
    %v298 = vld [vmem:[%s5 + $0x20] sm:$0xff]
    %v299 = vld [vmem:[%s5 + $0x28] sm:$0xff]
    %v300 = vld [vmem:[%s5 + $0x30] sm:$0xff]
    %v301 = vld [vmem:[%s5 + $0x38] sm:$0xff]
    %v302 = vld [vmem:[%s5 + $0x40] sm:$0xff]
    %v303 = vld [vmem:[%s5 + $0x48] sm:$0xff]
    %v304 = vld [vmem:[%s5 + $0x50] sm:$0xff]
    %v305 = vld [vmem:[%s5 + $0x58] sm:$0xff]
    %v306 = vld [vmem:[%s5 + $0x60] sm:$0xff]
    %v307 = vld [vmem:[%s5 + $0x68] sm:$0xff]
    %v308 = vld [vmem:[%s5 + $0x70] sm:$0xff]
    %v309 = vld [vmem:[%s5 + $0x78] sm:$0xff]
    %v310 = vld [vmem:[#allocation9] sm:$0x1]
    %v312 = vlaneseq
    %v313 = vshrl.u32 %v312, 7
    %v314 = vsub.s32 0, %v313
    %v315 = vrot.slane %v310, %v314
    %317 = vmatprep.subr.mxu0 0.0
    %318 = vmatpush1.msra.mxu0 %v309
    %319 = vmatprep.subr.mxu0 0.0
    %320 = vmatpush1.msra.mxu0 %v308
    %321 = vmatprep.subr.mxu0 0.0
    %322 = vmatpush1.msra.mxu0 %v307
    %323 = vmatprep.subr.mxu0 0.0
    %324 = vmatpush1.msra.mxu0 %v306
    %325 = vmatprep.subr.mxu0 0.0
    %326 = vmatpush1.msra.mxu0 %v305
    %327 = vmatprep.subr.mxu0 0.0
    %328 = vmatpush1.msra.mxu0 %v304
    %329 = vmatprep.subr.mxu0 0.0
    %330 = vmatpush1.msra.mxu0 %v303
    %331 = vmatprep.subr.mxu0 0.0
    %332 = vmatpush1.msra.mxu0 %v302
    %333 = vmatprep.subr.mxu0 0.0
    %334 = vmatpush1.msra.mxu0 %v301
    %335 = vmatprep.subr.mxu0 0.0
    %336 = vmatpush1.msra.mxu0 %v300
    %337 = vmatprep.subr.mxu0 0.0
    %338 = vmatpush1.msra.mxu0 %v299
    %339 = vmatprep.subr.mxu0 0.0
    %340 = vmatpush1.msra.mxu0 %v298
    %341 = vmatprep.subr.mxu0 0.0
    %342 = vmatpush1.msra.mxu0 %v297
    %343 = vmatprep.subr.mxu0 0.0
    %344 = vmatpush1.msra.mxu0 %v296
    %345 = vmatprep.subr.mxu0 0.0
    %346 = vmatpush1.msra.mxu0 %v295
    %347 = vmatprep.subr.mxu0 0.0
    %348 = vmatpush1.msra.mxu0 %v294
    %349 = vmatprep.subr.mxu0 0.0
    %350 = vmatpush2.msra.mxu0 0.0
    %351 = vmatprep.subr.mxu0 0.0
    %352 = vmatpush2.msra.mxu0 0.0
    %353 = vmatprep.subr.mxu0 0.0
    %354 = vmatpush2.msra.mxu0 0.0
    %355 = vmatprep.subr.mxu0 0.0
    %356 = vmatpush2.msra.mxu0 0.0
    %357 = vmatprep.subr.mxu0 0.0
    %358 = vmatpush2.msra.mxu0 0.0
    %359 = vmatprep.subr.mxu0 0.0
    %360 = vmatpush2.msra.mxu0 0.0
    %361 = vmatprep.subr.mxu0 0.0
    %362 = vmatpush2.msra.mxu0 0.0
    %363 = vmatprep.subr.mxu0 0.0
    %364 = vmatpush2.msra.mxu0 0.0
    %365 = vmatprep.subr.mxu0 0.0
    %366 = vmatpush2.msra.mxu0 0.0
    %367 = vmatprep.subr.mxu0 0.0
    %368 = vmatpush2.msra.mxu0 0.0
    %369 = vmatprep.subr.mxu0 0.0
    %370 = vmatpush2.msra.mxu0 0.0
    %371 = vmatprep.subr.mxu0 0.0
    %372 = vmatpush2.msra.mxu0 0.0
    %373 = vmatprep.subr.mxu0 0.0
    %374 = vmatpush2.msra.mxu0 0.0
    %375 = vmatprep.subr.mxu0 0.0
    %376 = vmatpush2.msra.mxu0 0.0
    %377 = vmatprep.subr.mxu0 0.0
    %378 = vmatpush2.msra.mxu0 0.0
    %379 = vmatprep.subr.mxu0 0.0
    %380 = vmatpush2.msra.mxu0 0.0
    %381 = vmatprep.mubr.f32.mxu0 0.0
    %382 = vmatmul.mubr.f32.gmra.mxu0 %v292
    %v383 = vpop.f32.mrf.mxu0
    %v384 = vadd.f32 %v315, %v383
    %v385 = vpop.f32.mrf.mxu0
    %386 = vmatprep.mubr.f32.mxu0 0.0
    %387 = vmatmul.mubr.f32.gmra.mxu0 %v293
    %v388 = vpop.f32.mrf.mxu0
    %v389 = vadd.f32 %v315, %v388
    %v390 = vpop.f32.mrf.mxu0
    %391 = vdwg.mxu0
    %v392 = vmax.f32 %v384, 0.0
    %v393 = vmax.f32 %v389, 0.0
    %v394 = vld [vmem:[%s7] sm:$0xff]
    %v395 = vld [vmem:[%s7 + $0x8] sm:$0xff]
    %v396 = vld [vmem:[%s7 + $0x10] sm:$0xff]
    %v397 = vld [vmem:[%s7 + $0x18] sm:$0xff]
    %v398 = vld [vmem:[%s7 + $0x20] sm:$0xff]
    %v399 = vld [vmem:[%s7 + $0x28] sm:$0xff]
    %v400 = vld [vmem:[%s7 + $0x30] sm:$0xff]
    %v401 = vld [vmem:[%s7 + $0x38] sm:$0xff]
    %v402 = vld [vmem:[%s7 + $0x40] sm:$0xff]
    %v403 = vld [vmem:[%s7 + $0x48] sm:$0xff]
    %v404 = vld [vmem:[%s7 + $0x50] sm:$0xff]
    %v405 = vld [vmem:[%s7 + $0x58] sm:$0xff]
    %v406 = vld [vmem:[%s7 + $0x60] sm:$0xff]
    %v407 = vld [vmem:[%s7 + $0x68] sm:$0xff]
    %v408 = vld [vmem:[%s7 + $0x70] sm:$0xff]
    %v409 = vld [vmem:[%s7 + $0x78] sm:$0xff]
    %v410 = vld [vmem:[%s8] sm:$0x1]
    %v412 = vlaneseq
    %v413 = vshrl.u32 %v412, 7
    %v414 = vsub.s32 0, %v413
    %v415 = vrot.slane %v410, %v414
    %417 = vmatprep.subr.mxu0 0.0
    %418 = vmatpush1.msra.mxu0 %v409
    %419 = vmatprep.subr.mxu0 0.0
    %420 = vmatpush1.msra.mxu0 %v408
    %421 = vmatprep.subr.mxu0 0.0
    %422 = vmatpush1.msra.mxu0 %v407
    %423 = vmatprep.subr.mxu0 0.0
    %424 = vmatpush1.msra.mxu0 %v406
    %425 = vmatprep.subr.mxu0 0.0
    %426 = vmatpush1.msra.mxu0 %v405
    %427 = vmatprep.subr.mxu0 0.0
    %428 = vmatpush1.msra.mxu0 %v404
    %429 = vmatprep.subr.mxu0 0.0
    %430 = vmatpush1.msra.mxu0 %v403
    %431 = vmatprep.subr.mxu0 0.0
    %432 = vmatpush1.msra.mxu0 %v402
    %433 = vmatprep.subr.mxu0 0.0
    %434 = vmatpush1.msra.mxu0 %v401
    %435 = vmatprep.subr.mxu0 0.0
    %436 = vmatpush1.msra.mxu0 %v400
    %437 = vmatprep.subr.mxu0 0.0
    %438 = vmatpush1.msra.mxu0 %v399
    %439 = vmatprep.subr.mxu0 0.0
    %440 = vmatpush1.msra.mxu0 %v398
    %441 = vmatprep.subr.mxu0 0.0
    %442 = vmatpush1.msra.mxu0 %v397
    %443 = vmatprep.subr.mxu0 0.0
    %444 = vmatpush1.msra.mxu0 %v396
    %445 = vmatprep.subr.mxu0 0.0
    %446 = vmatpush1.msra.mxu0 %v395
    %447 = vmatprep.subr.mxu0 0.0
    %448 = vmatpush1.msra.mxu0 %v394
    %449 = vmatprep.subr.mxu0 0.0
    %450 = vmatpush2.msra.mxu0 0.0
    %451 = vmatprep.subr.mxu0 0.0
    %452 = vmatpush2.msra.mxu0 0.0
    %453 = vmatprep.subr.mxu0 0.0
    %454 = vmatpush2.msra.mxu0 0.0
    %455 = vmatprep.subr.mxu0 0.0
    %456 = vmatpush2.msra.mxu0 0.0
    %457 = vmatprep.subr.mxu0 0.0
    %458 = vmatpush2.msra.mxu0 0.0
    %459 = vmatprep.subr.mxu0 0.0
    %460 = vmatpush2.msra.mxu0 0.0
    %461 = vmatprep.subr.mxu0 0.0
    %462 = vmatpush2.msra.mxu0 0.0
    %463 = vmatprep.subr.mxu0 0.0
    %464 = vmatpush2.msra.mxu0 0.0
    %465 = vmatprep.subr.mxu0 0.0
    %466 = vmatpush2.msra.mxu0 0.0
    %467 = vmatprep.subr.mxu0 0.0
    %468 = vmatpush2.msra.mxu0 0.0
    %469 = vmatprep.subr.mxu0 0.0
    %470 = vmatpush2.msra.mxu0 0.0
    %471 = vmatprep.subr.mxu0 0.0
    %472 = vmatpush2.msra.mxu0 0.0
    %473 = vmatprep.subr.mxu0 0.0
    %474 = vmatpush2.msra.mxu0 0.0
    %475 = vmatprep.subr.mxu0 0.0
    %476 = vmatpush2.msra.mxu0 0.0
    %477 = vmatprep.subr.mxu0 0.0
    %478 = vmatpush2.msra.mxu0 0.0
    %479 = vmatprep.subr.mxu0 0.0
    %480 = vmatpush2.msra.mxu0 0.0
    %481 = vmatprep.mubr.f32.mxu0 0.0
    %482 = vmatmul.mubr.f32.gmra.mxu0 %v392
    %v483 = vpop.f32.mrf.mxu0
    %v484 = vadd.f32 %v415, %v483
    %v485 = vpop.f32.mrf.mxu0
    %486 = vmatprep.mubr.f32.mxu0 0.0
    %487 = vmatmul.mubr.f32.gmra.mxu0 %v393
    %v488 = vpop.f32.mrf.mxu0
    %v489 = vadd.f32 %v415, %v488
    %v490 = vpop.f32.mrf.mxu0
    %491 = vdwg.mxu0
    %v492 = vmax.f32 %v484, 0.0
    %v493 = vmax.f32 %v489, 0.0
    %v494 = vld [vmem:[%s9] sm:$0xff]
    %v495 = vld [vmem:[%s9 + $0x8] sm:$0xff]
    %v496 = vld [vmem:[%s9 + $0x10] sm:$0xff]
    %v497 = vld [vmem:[%s9 + $0x18] sm:$0xff]
    %v498 = vld [vmem:[%s9 + $0x20] sm:$0xff]
    %v499 = vld [vmem:[%s9 + $0x28] sm:$0xff]
    %v500 = vld [vmem:[%s9 + $0x30] sm:$0xff]
    %v501 = vld [vmem:[%s9 + $0x38] sm:$0xff]
    %v502 = vld [vmem:[%s9 + $0x40] sm:$0xff]
    %v503 = vld [vmem:[%s9 + $0x48] sm:$0xff]
    %v504 = vld [vmem:[%s9 + $0x50] sm:$0xff]
    %v505 = vld [vmem:[%s9 + $0x58] sm:$0xff]
    %v506 = vld [vmem:[%s9 + $0x60] sm:$0xff]
    %v507 = vld [vmem:[%s9 + $0x68] sm:$0xff]
    %v508 = vld [vmem:[%s9 + $0x70] sm:$0xff]
    %v509 = vld [vmem:[%s9 + $0x78] sm:$0xff]
    %v510 = vld [vmem:[%s10] sm:$0x1]
    %v512 = vlaneseq
    %v513 = vshrl.u32 %v512, 7
    %v514 = vsub.s32 0, %v513
    %v515 = vrot.slane %v510, %v514
    %517 = vmatprep.subr.mxu0 0.0
    %518 = vmatpush1.msra.mxu0 %v509
    %519 = vmatprep.subr.mxu0 0.0
    %520 = vmatpush1.msra.mxu0 %v508
    %521 = vmatprep.subr.mxu0 0.0
    %522 = vmatpush1.msra.mxu0 %v507
    %523 = vmatprep.subr.mxu0 0.0
    %524 = vmatpush1.msra.mxu0 %v506
    %525 = vmatprep.subr.mxu0 0.0
    %526 = vmatpush1.msra.mxu0 %v505
    %527 = vmatprep.subr.mxu0 0.0
    %528 = vmatpush1.msra.mxu0 %v504
    %529 = vmatprep.subr.mxu0 0.0
    %530 = vmatpush1.msra.mxu0 %v503
    %531 = vmatprep.subr.mxu0 0.0
    %532 = vmatpush1.msra.mxu0 %v502
    %533 = vmatprep.subr.mxu0 0.0
    %534 = vmatpush1.msra.mxu0 %v501
    %535 = vmatprep.subr.mxu0 0.0
    %536 = vmatpush1.msra.mxu0 %v500
    %537 = vmatprep.subr.mxu0 0.0
    %538 = vmatpush1.msra.mxu0 %v499
    %539 = vmatprep.subr.mxu0 0.0
    %540 = vmatpush1.msra.mxu0 %v498
    %541 = vmatprep.subr.mxu0 0.0
    %542 = vmatpush1.msra.mxu0 %v497
    %543 = vmatprep.subr.mxu0 0.0
    %544 = vmatpush1.msra.mxu0 %v496
    %545 = vmatprep.subr.mxu0 0.0
    %546 = vmatpush1.msra.mxu0 %v495
    %547 = vmatprep.subr.mxu0 0.0
    %548 = vmatpush1.msra.mxu0 %v494
    %549 = vmatprep.subr.mxu0 0.0
    %550 = vmatpush2.msra.mxu0 0.0
    %551 = vmatprep.subr.mxu0 0.0
    %552 = vmatpush2.msra.mxu0 0.0
    %553 = vmatprep.subr.mxu0 0.0
    %554 = vmatpush2.msra.mxu0 0.0
    %555 = vmatprep.subr.mxu0 0.0
    %556 = vmatpush2.msra.mxu0 0.0
    %557 = vmatprep.subr.mxu0 0.0
    %558 = vmatpush2.msra.mxu0 0.0
    %559 = vmatprep.subr.mxu0 0.0
    %560 = vmatpush2.msra.mxu0 0.0
    %561 = vmatprep.subr.mxu0 0.0
    %562 = vmatpush2.msra.mxu0 0.0
    %563 = vmatprep.subr.mxu0 0.0
    %564 = vmatpush2.msra.mxu0 0.0
    %565 = vmatprep.subr.mxu0 0.0
    %566 = vmatpush2.msra.mxu0 0.0
    %567 = vmatprep.subr.mxu0 0.0
    %568 = vmatpush2.msra.mxu0 0.0
    %569 = vmatprep.subr.mxu0 0.0
    %570 = vmatpush2.msra.mxu0 0.0
    %571 = vmatprep.subr.mxu0 0.0
    %572 = vmatpush2.msra.mxu0 0.0
    %573 = vmatprep.subr.mxu0 0.0
    %574 = vmatpush2.msra.mxu0 0.0
    %575 = vmatprep.subr.mxu0 0.0
    %576 = vmatpush2.msra.mxu0 0.0
    %577 = vmatprep.subr.mxu0 0.0
    %578 = vmatpush2.msra.mxu0 0.0
    %579 = vmatprep.subr.mxu0 0.0
    %580 = vmatpush2.msra.mxu0 0.0
    %581 = vmatprep.mubr.f32.mxu0 0.0
    %582 = vmatmul.mubr.f32.gmra.mxu0 %v492
    %v583 = vpop.f32.mrf.mxu0
    %v584 = vadd.f32 %v515, %v583
    %v585 = vpop.f32.mrf.mxu0
    %586 = vmatprep.mubr.f32.mxu0 0.0
    %587 = vmatmul.mubr.f32.gmra.mxu0 %v493
    %v588 = vpop.f32.mrf.mxu0
    %v589 = vadd.f32 %v515, %v588
    %v590 = vpop.f32.mrf.mxu0
    %591 = vdwg.mxu0
    %v592 = vmax.f32 %v584, 0.0
    %v593 = vmax.f32 %v589, 0.0
    %v594 = vld [vmem:[%s11] sm:$0xff]
    %v595 = vld [vmem:[%s11 + $0x8] sm:$0xff]
    %v596 = vld [vmem:[%s11 + $0x10] sm:$0xff]
    %v597 = vld [vmem:[%s11 + $0x18] sm:$0xff]
    %v598 = vld [vmem:[%s11 + $0x20] sm:$0xff]
    %v599 = vld [vmem:[%s11 + $0x28] sm:$0xff]
    %v600 = vld [vmem:[%s11 + $0x30] sm:$0xff]
    %v601 = vld [vmem:[%s11 + $0x38] sm:$0xff]
    %v602 = vld [vmem:[%s11 + $0x40] sm:$0xff]
    %v603 = vld [vmem:[%s11 + $0x48] sm:$0xff]
    %v604 = vld [vmem:[%s11 + $0x50] sm:$0xff]
    %v605 = vld [vmem:[%s11 + $0x58] sm:$0xff]
    %v606 = vld [vmem:[%s11 + $0x60] sm:$0xff]
    %v607 = vld [vmem:[%s11 + $0x68] sm:$0xff]
    %v608 = vld [vmem:[%s11 + $0x70] sm:$0xff]
    %v609 = vld [vmem:[%s11 + $0x78] sm:$0xff]
    %v610 = vld [vmem:[%s12] sm:$0x1]
    %v612 = vlaneseq
    %v613 = vshrl.u32 %v612, 7
    %v614 = vsub.s32 0, %v613
    %v615 = vrot.slane %v610, %v614
    %617 = vmatprep.subr.mxu0 0.0
    %618 = vmatpush1.msra.mxu0 %v609
    %619 = vmatprep.subr.mxu0 0.0
    %620 = vmatpush1.msra.mxu0 %v608
    %621 = vmatprep.subr.mxu0 0.0
    %622 = vmatpush1.msra.mxu0 %v607
    %623 = vmatprep.subr.mxu0 0.0
    %624 = vmatpush1.msra.mxu0 %v606
    %625 = vmatprep.subr.mxu0 0.0
    %626 = vmatpush1.msra.mxu0 %v605
    %627 = vmatprep.subr.mxu0 0.0
    %628 = vmatpush1.msra.mxu0 %v604
    %629 = vmatprep.subr.mxu0 0.0
    %630 = vmatpush1.msra.mxu0 %v603
    %631 = vmatprep.subr.mxu0 0.0
    %632 = vmatpush1.msra.mxu0 %v602
    %633 = vmatprep.subr.mxu0 0.0
    %634 = vmatpush1.msra.mxu0 %v601
    %635 = vmatprep.subr.mxu0 0.0
    %636 = vmatpush1.msra.mxu0 %v600
    %637 = vmatprep.subr.mxu0 0.0
    %638 = vmatpush1.msra.mxu0 %v599
    %639 = vmatprep.subr.mxu0 0.0
    %640 = vmatpush1.msra.mxu0 %v598
    %641 = vmatprep.subr.mxu0 0.0
    %642 = vmatpush1.msra.mxu0 %v597
    %643 = vmatprep.subr.mxu0 0.0
    %644 = vmatpush1.msra.mxu0 %v596
    %645 = vmatprep.subr.mxu0 0.0
    %646 = vmatpush1.msra.mxu0 %v595
    %647 = vmatprep.subr.mxu0 0.0
    %648 = vmatpush1.msra.mxu0 %v594
    %649 = vmatprep.subr.mxu0 0.0
    %650 = vmatpush2.msra.mxu0 0.0
    %651 = vmatprep.subr.mxu0 0.0
    %652 = vmatpush2.msra.mxu0 0.0
    %653 = vmatprep.subr.mxu0 0.0
    %654 = vmatpush2.msra.mxu0 0.0
    %655 = vmatprep.subr.mxu0 0.0
    %656 = vmatpush2.msra.mxu0 0.0
    %657 = vmatprep.subr.mxu0 0.0
    %658 = vmatpush2.msra.mxu0 0.0
    %659 = vmatprep.subr.mxu0 0.0
    %660 = vmatpush2.msra.mxu0 0.0
    %661 = vmatprep.subr.mxu0 0.0
    %662 = vmatpush2.msra.mxu0 0.0
    %663 = vmatprep.subr.mxu0 0.0
    %664 = vmatpush2.msra.mxu0 0.0
    %665 = vmatprep.subr.mxu0 0.0
    %666 = vmatpush2.msra.mxu0 0.0
    %667 = vmatprep.subr.mxu0 0.0
    %668 = vmatpush2.msra.mxu0 0.0
    %669 = vmatprep.subr.mxu0 0.0
    %670 = vmatpush2.msra.mxu0 0.0
    %671 = vmatprep.subr.mxu0 0.0
    %672 = vmatpush2.msra.mxu0 0.0
    %673 = vmatprep.subr.mxu0 0.0
    %674 = vmatpush2.msra.mxu0 0.0
    %675 = vmatprep.subr.mxu0 0.0
    %676 = vmatpush2.msra.mxu0 0.0
    %677 = vmatprep.subr.mxu0 0.0
    %678 = vmatpush2.msra.mxu0 0.0
    %679 = vmatprep.subr.mxu0 0.0
    %680 = vmatpush2.msra.mxu0 0.0
    %681 = vmatprep.mubr.f32.mxu0 0.0
    %682 = vmatmul.mubr.f32.gmra.mxu0 %v492
    %v683 = vpop.f32.mrf.mxu0
    %v684 = vadd.f32 %v615, %v683
    %v685 = vpop.f32.mrf.mxu0
    %686 = vmatprep.mubr.f32.mxu0 0.0
    %687 = vmatmul.mubr.f32.gmra.mxu0 %v493
    %v688 = vpop.f32.mrf.mxu0
    %v689 = vadd.f32 %v615, %v688
    %v690 = vpop.f32.mrf.mxu0
    %691 = vdwg.mxu0
    %v692 = vmax.f32 %v684, 0.0
    %v693 = vmax.f32 %v689, 0.0
    %v694 = vadd.f32 %v592, %v692
    %v695 = vadd.f32 %v593, %v693
    %vm696 = vcmask 64512
    %697 = vst.msk [vmem:[%s13] sm:$0xff] %vm696, %v694
    %698 = vst.msk [vmem:[%s13 + $0x8] sm:$0xff] %vm696, %v695
    // Predicated region
    $region74: #{bottlenecks_forward.1} parent=1 // pred_check
      _
    $region75: #{bottlenecks_forward.1} parent=1 // pred_check_branch
      %700 = sbr.rel (0) target = $region77
    $region76: #{bottlenecks_forward.1} parent=1 // pred_region
      _
    $region77: #{bottlenecks_forward.1} parent=1 // pred_fallthru
      _
    // Predicated region
    $region78: #{bottlenecks_forward.1} parent=1 // pred_check
      _
    $region79: #{bottlenecks_forward.1} parent=1 // pred_check_branch
      %702 = sbr.rel (0) target = $region81
    $region80: #{bottlenecks_forward.1} parent=1 // pred_region
      _
    $region81: #{bottlenecks_forward.1} parent=1 // pred_fallthru
      _
    %703 = vsyncpa [#allocation3], 1
    %704 = vsyncpa [#allocation5], 1
    %705 = vsyncpa [#allocation8], 1

</llo_original>
